<compile_context>
chip_gen: v5e
topology: v5e:2x2
jax: 0.10.0
libtpu: 0.0.40
codegen_flags: <defaults>
</compile_context>

<pallas_src>
import math

import jax
import jax.numpy as jnp
from jax.experimental import pallas as pl
from jax.experimental.pallas import tpu as pltpu

HIDDEN = 100           # logical hidden width (PyTorch)
HPAD = 128             # lane-padded hidden width
OUT_NUM = 1
OUT_DIM = 3 + OUT_NUM  # 4


def _recognizer_kernel(img_ref, w1t_ref, wcat_ref, l1_ref, res_ref):
    # Cast activations to bf16 so both matmuls run MXU-native; accumulate in f32.
    img = img_ref[...].astype(jnp.bfloat16)     # [TB, D]
    w1t = w1t_ref[...]                          # [D, 128]   bf16, cols >=100 zero
    wcat = wcat_ref[...]                        # [128, 128] bf16, [W2.T | W3.T | 0]

    # layer1 = relu(img @ W1^T); padded lanes 100..127 stay exactly zero.
    layer1 = jnp.maximum(
        jnp.dot(img, w1t, preferred_element_type=jnp.float32), 0.0)
    l1_ref[...] = layer1                        # [TB, 128] lane-dense f32

    # Single fused MXU pass: cols [0:100] = layer1 @ W2^T, cols [100:104] = out.
    res_ref[...] = jnp.dot(layer1.astype(jnp.bfloat16), wcat,
                           preferred_element_type=jnp.float32)


def prepare_params(w1, w2, w3):
    """One-time weight prep (outside the hot path): transpose, pad, fuse, bf16.

    w1: [100, D], w2: [100, 100], w3: [4, 100]  (PyTorch [out, in] layout)
    Returns:
      w1t_pad: [D, 128]   bf16 = [W1.T | 0]
      w_cat:   [128, 128] bf16 = [[W2.T  W3.T  0], [0 0 0]]
    """
    D = w1.shape[1]
    w1t_pad = jnp.zeros((D, HPAD), jnp.float32).at[:, :HIDDEN].set(w1.T)
    w_cat = jnp.zeros((HPAD, HPAD), jnp.float32)
    w_cat = w_cat.at[:HIDDEN, :HIDDEN].set(w2.T)
    w_cat = w_cat.at[:HIDDEN, HIDDEN:HIDDEN + OUT_DIM].set(w3.T)
    return w1t_pad.astype(jnp.bfloat16), w_cat.astype(jnp.bfloat16)


@jax.jit
def recognizer_forward(img, w1t_pad, w_cat):
    """img: [B, D] f32; w1t_pad/w_cat from prepare_params() (bf16)."""
    B, D = img.shape

    # Batch tile: multiple of 8 sublanes, capped so VMEM tiles stay modest.
    TILE_B = min(256, max(8, -(-B // 8) * 8))
    Bp = -(-B // TILE_B) * TILE_B
    img_p = img if Bp == B else jnp.pad(img, ((0, Bp - B), (0, 0)))

    l1p, resp = pl.pallas_call(
        _recognizer_kernel,
        out_shape=(jax.ShapeDtypeStruct((Bp, HPAD), jnp.float32),   # layer1 (padded)
                   jax.ShapeDtypeStruct((Bp, HPAD), jnp.float32)),  # [layer2_pre|out]
        grid=(Bp // TILE_B,),
        in_specs=[pl.BlockSpec((TILE_B, D), lambda i: (i, 0)),
                  pl.BlockSpec((D, HPAD), lambda i: (0, 0)),
                  pl.BlockSpec((HPAD, HPAD), lambda i: (0, 0))],
        out_specs=(pl.BlockSpec((TILE_B, HPAD), lambda i: (i, 0)),
                   pl.BlockSpec((TILE_B, HPAD), lambda i: (i, 0))),
        compiler_params=pltpu.CompilerParams(
            dimension_semantics=("parallel",)),
    )(img_p, w1t_pad, w_cat)

    l1p = l1p[:B]
    resp = resp[:B]

    # Cheap XLA-side ops (fused under jit) to recover the logical outputs.
    h0 = jnp.mean(img, axis=0, keepdims=True)                       # [1, D]  (f32 exact)
    layer1 = l1p[:, :HIDDEN]                                        # [B, 100]
    out = resp[:, HIDDEN:HIDDEN + OUT_DIM]                          # [B, 4]
    h2 = jnp.mean(jnp.maximum(resp[:, :HIDDEN], 0.0),               # [1, 100]
                  axis=0, keepdims=True)
    return out[:, :OUT_NUM], out, (h0, layer1, h2)


def init_params(key, img_size):
    """Deterministic replica of reset_parameters()."""
    k1, k2, k3 = jax.random.split(key, 3)
    stdv1 = 1.0 / math.sqrt(1000.0)
    stdv23 = 1.0 / math.sqrt(500.0)
    w1 = jax.random.uniform(k1, (HIDDEN, img_size), jnp.float32, -stdv1, stdv1)
    w2 = jax.random.uniform(k2, (HIDDEN, HIDDEN), jnp.float32, -stdv23, stdv23)
    w3 = jax.random.uniform(k3, (OUT_DIM, HIDDEN), jnp.float32, -stdv23, stdv23)
    return w1, w2, w3


if __name__ == "__main__":
    key = jax.random.PRNGKey(0)
    k_img, k_param = jax.random.split(key)

    B = 8
    IMG_SIZE = 256  # e.g. a flattened 16x16 image

    img = jax.random.normal(k_img, (B, IMG_SIZE), dtype=jnp.float32)
    w1, w2, w3 = init_params(k_param, IMG_SIZE)

    # One-time weight prep (amortized across all forward calls).
    w1t_pad, w_cat = prepare_params(w1, w2, w3)
    w1t_pad, w_cat = jax.block_until_ready((w1t_pad, w_cat))

    out1, out, (h0, l1, h2) = recognizer_forward(img, w1t_pad, w_cat)
    jax.block_until_ready((out1, out, h0, l1, h2))

    # Sanity check against plain-JAX f32 reference (bf16 inputs => loose tol).
    l1_ref = jnp.maximum(img @ w1.T, 0.0)
    l2_ref = jnp.maximum(l1_ref @ w2.T, 0.0)
    out_ref = l1_ref @ w3.T
    assert jnp.allclose(out, out_ref, atol=2e-2, rtol=2e-2)
    assert jnp.allclose(out1, out_ref[:, :OUT_NUM], atol=2e-2, rtol=2e-2)
    assert jnp.allclose(h0, jnp.mean(img, axis=0, keepdims=True), atol=1e-5)
    assert jnp.allclose(l1, l1_ref, atol=2e-2, rtol=2e-2)
    assert jnp.allclose(h2, jnp.mean(l2_ref, axis=0, keepdims=True),
                        atol=2e-2, rtol=2e-2)

    print("KERNEL_OK")
</pallas_src>

<mosaic_0001>
module attributes {stable_mosaic.version = 11 : i64} {
  func.func @_recognizer_kernel(%arg0: i32, %arg1: memref<8x256xf32, #tpu.memory_space<vmem>>, %arg2: memref<256x128xbf16, #tpu.memory_space<vmem>>, %arg3: memref<128x128xbf16, #tpu.memory_space<vmem>>, %arg4: memref<8x128xf32, #tpu.memory_space<vmem>>, %arg5: memref<8x128xf32, #tpu.memory_space<vmem>>) attributes {dimension_semantics = [#tpu.dimension_semantics<parallel>], iteration_bounds = array<i64: 1>, scalar_prefetch = 0 : i64, scratch_operands = 0 : i64, tpu.core_type = #tpu.core_type<tc>, window_params = [{transform_indices = @transform_0, window_bounds = array<i64: 8, 256>}, {pipeline_mode = #tpu.pipeline_mode<synchronous>, transform_indices = @transform_1, window_bounds = array<i64: 256, 128>}, {pipeline_mode = #tpu.pipeline_mode<synchronous>, transform_indices = @transform_2, window_bounds = array<i64: 128, 128>}, {transform_indices = @transform_3, window_bounds = array<i64: 8, 128>}, {transform_indices = @transform_4, window_bounds = array<i64: 8, 128>}]} {
    %c0 = arith.constant 0 : index
    %c0_0 = arith.constant 0 : index
    %0 = vector.load %arg1[%c0, %c0_0] : memref<8x256xf32, #tpu.memory_space<vmem>>, vector<8x256xf32>
    %1 = arith.truncf %0 : vector<8x256xf32> to vector<8x256xbf16>
    %c0_1 = arith.constant 0 : index
    %c0_2 = arith.constant 0 : index
    %2 = vector.load %arg2[%c0_1, %c0_2] : memref<256x128xbf16, #tpu.memory_space<vmem>>, vector<256x128xbf16>
    %c0_3 = arith.constant 0 : index
    %c0_4 = arith.constant 0 : index
    %3 = vector.load %arg3[%c0_3, %c0_4] : memref<128x128xbf16, #tpu.memory_space<vmem>>, vector<128x128xbf16>
    %cst = arith.constant dense<0.000000e+00> : vector<8x128xf32>
    %4 = tpu.matmul %1, %2, %cst {dimension_numbers = #tpu.dot_dimension_numbers<[1], [0], [0], [1], [0, 0, 1, 1], [], []>} : vector<8x256xbf16>, vector<256x128xbf16>, vector<8x128xf32> -> vector<8x128xf32>
    %cst_5 = arith.constant 0.000000e+00 : f32
    %5 = vector.broadcast %cst_5 : f32 to vector<8x128xf32>
    %6 = arith.maximumf %4, %5 : vector<8x128xf32>
    %c0_6 = arith.constant 0 : index
    %c0_7 = arith.constant 0 : index
    %7 = vector.load %arg4[%c0_6, %c0_7] : memref<8x128xf32, #tpu.memory_space<vmem>>, vector<8x128xf32>
    tpu.vector_store %arg4[%c0_6, %c0_7], %6 {strides = array<i32>} : memref<8x128xf32, #tpu.memory_space<vmem>>, vector<8x128xf32>,
    %8 = arith.truncf %6 : vector<8x128xf32> to vector<8x128xbf16>
    %cst_8 = arith.constant dense<0.000000e+00> : vector<8x128xf32>
    %9 = tpu.matmul %8, %3, %cst_8 {dimension_numbers = #tpu.dot_dimension_numbers<[1], [0], [0], [1], [0, 0, 1, 1], [], []>} : vector<8x128xbf16>, vector<128x128xbf16>, vector<8x128xf32> -> vector<8x128xf32>
    %c0_9 = arith.constant 0 : index
    %c0_10 = arith.constant 0 : index
    %10 = vector.load %arg5[%c0_9, %c0_10] : memref<8x128xf32, #tpu.memory_space<vmem>>, vector<8x128xf32>
    tpu.vector_store %arg5[%c0_9, %c0_10], %9 {strides = array<i32>} : memref<8x128xf32, #tpu.memory_space<vmem>>, vector<8x128xf32>,
    return
  }
  func.func @transform_0(%arg0: i32) -> (i32, i32) {
    %c0_i32 = arith.constant 0 : i32
    %c0_i32_0 = arith.constant 0 : i32
    return %arg0, %c0_i32 : i32, i32
  }
  func.func @transform_1(%arg0: i32) -> (i32, i32) {
    %c0_i32 = arith.constant 0 : i32
    %c0_i32_0 = arith.constant 0 : i32
    %c0_i32_1 = arith.constant 0 : i32
    return %c0_i32, %c0_i32_0 : i32, i32
  }
  func.func @transform_2(%arg0: i32) -> (i32, i32) {
    %c0_i32 = arith.constant 0 : i32
    %c0_i32_0 = arith.constant 0 : i32
    %c0_i32_1 = arith.constant 0 : i32
    return %c0_i32, %c0_i32_0 : i32, i32
  }
  func.func @transform_3(%arg0: i32) -> (i32, i32) {
    %c0_i32 = arith.constant 0 : i32
    %c0_i32_0 = arith.constant 0 : i32
    return %arg0, %c0_i32 : i32, i32
  }
  func.func @transform_4(%arg0: i32) -> (i32, i32) {
    %c0_i32 = arith.constant 0 : i32
    %c0_i32_0 = arith.constant 0 : i32
    return %arg0, %c0_i32 : i32, i32
  }
}

</mosaic_0001>

<llo_original>
// kernel: recognizer_forward.1
$region0: #{recognizer_forward.1}
  #allocation0 [shape = 'u32[]', space=smem, size = 0x4, offset = 0x4, fixed_abs, tag = 'smem constant byte address 0x4 - core index']
  #allocation1 [shape = 'u32[72,128]{1,0:T(1,128)}', space=vmem, size = 0x9000, scoped, tag = 'internal scratch']
  %s0 = inlined_call_operand.vmem [shape: f32[8,256], index: 0, kind: input, shape index: {}]
  %s1 = inlined_call_operand.hbm [shape: bf16[256,128], index: 1, kind: input, shape index: {}]
  %s2 = inlined_call_operand.hbm [shape: bf16[128,128], index: 2, kind: input, shape index: {}]
  %s3 = inlined_call_operand.hbm [shape: f32[8,128], index: 3, kind: output, shape index: {0}]
  %s4 = inlined_call_operand.vmem [shape: f32[8,128], index: 4, kind: output, shape index: {1}]
  %5 = xla_tuple %s3, %s4
  %s6 = sld [smem:[#allocation0]]
  $region38: #{recognizer_forward.1} parent=0
    _
  %s8 = ssub.s32 1, %s6
  %s9 = scalar_select 0, %s8, %s6
  $region1: #{recognizer_forward.1} parent=0
    #allocation2 [shape = 'u8[65536]{0}', space=vmem, size = 0x10000, scoped, tag = 'input window, operand 1, single buffered']
    #allocation3 [shape = 's32[1]{0}', space=sflag, size = 0x4, scoped, tag = 'scoped memory for recognizer_forward.1']
    #allocation4 [shape = 's32[1]{0}', space=sflag, size = 0x4, scoped, tag = 'scoped memory for recognizer_forward.1']
    #allocation5 [shape = 'u8[32768]{0}', space=vmem, size = 0x8000, scoped, tag = 'input window, operand 2, single buffered']
    #allocation6 [shape = 's32[1]{0}', space=sflag, size = 0x4, scoped, tag = 'scoped memory for recognizer_forward.1']
    #allocation7 [shape = 'u8[4096]{0}', space=vmem, size = 0x1000, scoped, tag = 'output window, operand 0, single buffered']
    %10 = vsyncpa [#allocation3], 0
    %11 = vsyncpa [#allocation6], 0
    %12 = vsyncpa [#allocation4], 0
    // Predicated region
    $region2: #{recognizer_forward.1} parent=1 // pred_check
      _
    $region3: #{recognizer_forward.1} parent=1 // pred_check_branch
      %14 = sbr.rel (0) target = $region5
    $region4: #{recognizer_forward.1} parent=1 // pred_region
      _
    $region5: #{recognizer_forward.1} parent=1 // pred_fallthru
      _
    // Predicated region
    $region6: #{recognizer_forward.1} parent=1 // pred_check
      _
    $region7: #{recognizer_forward.1} parent=1 // pred_check_branch
      %16 = sbr.rel (0) target = $region9
    $region8: #{recognizer_forward.1} parent=1 // pred_region
      %18 = vsyncadd [#allocation3], 0
      %s19 = sshll.u32 %s1, 4
      %s20 = int_to_ptr.hbm [resolvable:$true] %s19
      %s21 = sshll.u32 [#allocation2], 4
      %s22 = int_to_ptr.vmem [resolvable:$true] %s21
      %27 = dma.hbm_to_vmem [thread:$0]  %s20, 2048, %s22, [#allocation3], 64, 64, 4
    $region9: #{recognizer_forward.1} parent=1 // pred_fallthru
      _
    // Predicated region
    $region10: #{recognizer_forward.1} parent=1 // pred_check
      _
    $region11: #{recognizer_forward.1} parent=1 // pred_check_branch
      %29 = sbr.rel (0) target = $region13
    $region12: #{recognizer_forward.1} parent=1 // pred_region
      %31 = vsyncadd [#allocation6], 0
      %s32 = sshll.u32 %s2, 4
      %s33 = int_to_ptr.hbm [resolvable:$true] %s32
      %s34 = sshll.u32 [#allocation5], 4
      %s35 = int_to_ptr.vmem [resolvable:$true] %s34
      %40 = dma.hbm_to_vmem [thread:$0]  %s33, 1024, %s35, [#allocation6], 64, 64, 4
    $region13: #{recognizer_forward.1} parent=1 // pred_fallthru
      _
    // Predicated region
    $region14: #{recognizer_forward.1} parent=1 // pred_check
      _
    $region15: #{recognizer_forward.1} parent=1 // pred_check_branch
      %42 = sbr.rel (0) target = $region17
    $region16: #{recognizer_forward.1} parent=1 // pred_region
      %44 = dma.done [#allocation3], 2048
    $region17: #{recognizer_forward.1} parent=1 // pred_fallthru
      _
    // Predicated region
    $region18: #{recognizer_forward.1} parent=1 // pred_check
      _
    $region19: #{recognizer_forward.1} parent=1 // pred_check_branch
      %46 = sbr.rel (0) target = $region21
    $region20: #{recognizer_forward.1} parent=1 // pred_region
      %48 = dma.done [#allocation6], 1024
    $region21: #{recognizer_forward.1} parent=1 // pred_fallthru
      _
    %v49 = vld [vmem:[%s0] sm:$0xff]
    %v50 = vld [vmem:[%s0 + $0x8] sm:$0xff]
    %v51 = vpack.c.bf16 %v49, %v49
    %v52 = vpack.c.bf16 %v50, %v50
    %v53 = vld [vmem:[#allocation2] sm:$0xf]
    %v54 = vld [vmem:[#allocation2 + $0x4] sm:$0xf]
    %v55 = vld [vmem:[#allocation2 + $0x8] sm:$0xf]
    %v56 = vld [vmem:[#allocation2 + $0xc] sm:$0xf]
    %v57 = vld [vmem:[#allocation2 + $0x10] sm:$0xf]
    %v58 = vld [vmem:[#allocation2 + $0x14] sm:$0xf]
    %v59 = vld [vmem:[#allocation2 + $0x18] sm:$0xf]
    %v60 = vld [vmem:[#allocation2 + $0x1c] sm:$0xf]
    %v61 = vld [vmem:[#allocation2 + $0x20] sm:$0xf]
    %v62 = vld [vmem:[#allocation2 + $0x24] sm:$0xf]
    %v63 = vld [vmem:[#allocation2 + $0x28] sm:$0xf]
    %v64 = vld [vmem:[#allocation2 + $0x2c] sm:$0xf]
    %v65 = vld [vmem:[#allocation2 + $0x30] sm:$0xf]
    %v66 = vld [vmem:[#allocation2 + $0x34] sm:$0xf]
    %v67 = vld [vmem:[#allocation2 + $0x38] sm:$0xf]
    %v68 = vld [vmem:[#allocation2 + $0x3c] sm:$0xf]
    %v69 = vld [vmem:[#allocation2 + $0x40] sm:$0xf]
    %v70 = vld [vmem:[#allocation2 + $0x44] sm:$0xf]
    %v71 = vld [vmem:[#allocation2 + $0x48] sm:$0xf]
    %v72 = vld [vmem:[#allocation2 + $0x4c] sm:$0xf]
    %v73 = vld [vmem:[#allocation2 + $0x50] sm:$0xf]
    %v74 = vld [vmem:[#allocation2 + $0x54] sm:$0xf]
    %v75 = vld [vmem:[#allocation2 + $0x58] sm:$0xf]
    %v76 = vld [vmem:[#allocation2 + $0x5c] sm:$0xf]
    %v77 = vld [vmem:[#allocation2 + $0x60] sm:$0xf]
    %v78 = vld [vmem:[#allocation2 + $0x64] sm:$0xf]
    %v79 = vld [vmem:[#allocation2 + $0x68] sm:$0xf]
    %v80 = vld [vmem:[#allocation2 + $0x6c] sm:$0xf]
    %v81 = vld [vmem:[#allocation2 + $0x70] sm:$0xf]
    %v82 = vld [vmem:[#allocation2 + $0x74] sm:$0xf]
    %v83 = vld [vmem:[#allocation2 + $0x78] sm:$0xf]
    %v84 = vld [vmem:[#allocation2 + $0x7c] sm:$0xf]
    %v85 = vld [vmem:[#allocation5] sm:$0xf]
    %v86 = vld [vmem:[#allocation5 + $0x4] sm:$0xf]
    %v87 = vld [vmem:[#allocation5 + $0x8] sm:$0xf]
    %v88 = vld [vmem:[#allocation5 + $0xc] sm:$0xf]
    %v89 = vld [vmem:[#allocation5 + $0x10] sm:$0xf]
    %v90 = vld [vmem:[#allocation5 + $0x14] sm:$0xf]
    %v91 = vld [vmem:[#allocation5 + $0x18] sm:$0xf]
    %v92 = vld [vmem:[#allocation5 + $0x1c] sm:$0xf]
    %v93 = vld [vmem:[#allocation5 + $0x20] sm:$0xf]
    %v94 = vld [vmem:[#allocation5 + $0x24] sm:$0xf]
    %v95 = vld [vmem:[#allocation5 + $0x28] sm:$0xf]
    %v96 = vld [vmem:[#allocation5 + $0x2c] sm:$0xf]
    %v97 = vld [vmem:[#allocation5 + $0x30] sm:$0xf]
    %v98 = vld [vmem:[#allocation5 + $0x34] sm:$0xf]
    %v99 = vld [vmem:[#allocation5 + $0x38] sm:$0xf]
    %v100 = vld [vmem:[#allocation5 + $0x3c] sm:$0xf]
    %v133 = vunpack.c.l.b16 %v53
    %v134 = vunpack.c.l.b16 %v54
    %v135 = vunpack.c.l.b16 %v55
    %v136 = vunpack.c.l.b16 %v56
    %v137 = vunpack.c.l.b16 %v57
    %v138 = vunpack.c.l.b16 %v58
    %v139 = vunpack.c.l.b16 %v59
    %v140 = vunpack.c.l.b16 %v60
    %v141 = vunpack.c.l.b16 %v61
    %v142 = vunpack.c.l.b16 %v62
    %v143 = vunpack.c.l.b16 %v63
    %v144 = vunpack.c.l.b16 %v64
    %v145 = vunpack.c.l.b16 %v65
    %v146 = vunpack.c.l.b16 %v66
    %v147 = vunpack.c.l.b16 %v67
    %v148 = vunpack.c.l.b16 %v68
    %v149 = vunpack.c.l.b16 %v69
    %v150 = vunpack.c.l.b16 %v70
    %v151 = vunpack.c.l.b16 %v71
    %v152 = vunpack.c.l.b16 %v72
    %v153 = vunpack.c.l.b16 %v73
    %v154 = vunpack.c.l.b16 %v74
    %v155 = vunpack.c.l.b16 %v75
    %v156 = vunpack.c.l.b16 %v76
    %v157 = vunpack.c.l.b16 %v77
    %v158 = vunpack.c.l.b16 %v78
    %v159 = vunpack.c.l.b16 %v79
    %v160 = vunpack.c.l.b16 %v80
    %v161 = vunpack.c.l.b16 %v81
    %v162 = vunpack.c.l.b16 %v82
    %v163 = vunpack.c.l.b16 %v83
    %v164 = vunpack.c.l.b16 %v84
    %v165 = vpack.c.b16 %v134, %v133
    %v166 = vpack.c.b16 %v136, %v135
    %v167 = vpack.c.b16 %v138, %v137
    %v168 = vpack.c.b16 %v140, %v139
    %v169 = vpack.c.b16 %v142, %v141
    %v170 = vpack.c.b16 %v144, %v143
    %v171 = vpack.c.b16 %v146, %v145
    %v172 = vpack.c.b16 %v148, %v147
    %v173 = vpack.c.b16 %v150, %v149
    %v174 = vpack.c.b16 %v152, %v151
    %v175 = vpack.c.b16 %v154, %v153
    %v176 = vpack.c.b16 %v156, %v155
    %v177 = vpack.c.b16 %v158, %v157
    %v178 = vpack.c.b16 %v160, %v159
    %v179 = vpack.c.b16 %v162, %v161
    %v180 = vpack.c.b16 %v164, %v163
    %197 = vmatpush.bf16.msra.mxu0 %v172
    %198 = vmatpush.bf16.msra.mxu0 %v171
    %199 = vmatpush.bf16.msra.mxu0 %v170
    %200 = vmatpush.bf16.msra.mxu0 %v169
    %201 = vmatpush.bf16.msra.mxu0 %v168
    %202 = vmatpush.bf16.msra.mxu0 %v167
    %203 = vmatpush.bf16.msra.mxu0 %v166
    %204 = vmatpush.bf16.msra.mxu0 %v165
    %205 = vmatmul.bf16.gmra.mxu0 %v51
    %v206 = vpop.f32.mrf.mxu0
    %v207 = vadd.f32 0.0, %v206
    %v208 = vpop.f32.mrf.mxu0
    %209 = vdwg.mxu0
    %210 = vmatpush.bf16.msra.mxu0 %v180
    %211 = vmatpush.bf16.msra.mxu0 %v179
    %212 = vmatpush.bf16.msra.mxu0 %v178
    %213 = vmatpush.bf16.msra.mxu0 %v177
    %214 = vmatpush.bf16.msra.mxu0 %v176
    %215 = vmatpush.bf16.msra.mxu0 %v175
    %216 = vmatpush.bf16.msra.mxu0 %v174
    %217 = vmatpush.bf16.msra.mxu0 %v173
    %218 = vmatmul.bf16.gmra.mxu0 %v52
    %v219 = vpop.f32.mrf.mxu0
    %v220 = vadd.f32 %v207, %v219
    %v221 = vpop.f32.mrf.mxu0
    %222 = vdwg.mxu0
    %v223 = vmax.f32 %v220, 0.0
    %224 = vst [vmem:[#allocation7] sm:$0xff] %v223
    %v225 = vpack.c.bf16 %v223, %v223
    %v242 = vunpack.c.l.b16 %v85
    %v243 = vunpack.c.l.b16 %v86
    %v244 = vunpack.c.l.b16 %v87
    %v245 = vunpack.c.l.b16 %v88
    %v246 = vunpack.c.l.b16 %v89
    %v247 = vunpack.c.l.b16 %v90
    %v248 = vunpack.c.l.b16 %v91
    %v249 = vunpack.c.l.b16 %v92
    %v250 = vunpack.c.l.b16 %v93
    %v251 = vunpack.c.l.b16 %v94
    %v252 = vunpack.c.l.b16 %v95
    %v253 = vunpack.c.l.b16 %v96
    %v254 = vunpack.c.l.b16 %v97
    %v255 = vunpack.c.l.b16 %v98
    %v256 = vunpack.c.l.b16 %v99
    %v257 = vunpack.c.l.b16 %v100
    %v258 = vpack.c.b16 %v243, %v242
    %v259 = vpack.c.b16 %v245, %v244
    %v260 = vpack.c.b16 %v247, %v246
    %v261 = vpack.c.b16 %v249, %v248
    %v262 = vpack.c.b16 %v251, %v250
    %v263 = vpack.c.b16 %v253, %v252
    %v264 = vpack.c.b16 %v255, %v254
    %v265 = vpack.c.b16 %v257, %v256
    %274 = vmatpush.bf16.msra.mxu0 %v265
    %275 = vmatpush.bf16.msra.mxu0 %v264
    %276 = vmatpush.bf16.msra.mxu0 %v263
    %277 = vmatpush.bf16.msra.mxu0 %v262
    %278 = vmatpush.bf16.msra.mxu0 %v261
    %279 = vmatpush.bf16.msra.mxu0 %v260
    %280 = vmatpush.bf16.msra.mxu0 %v259
    %281 = vmatpush.bf16.msra.mxu0 %v258
    %282 = vmatmul.bf16.gmra.mxu0 %v225
    %v283 = vpop.f32.mrf.mxu0
    %v284 = vadd.f32 0.0, %v283
    %v285 = vpop.f32.mrf.mxu0
    %286 = vdwg.mxu0
    %287 = vst [vmem:[%s4] sm:$0xff] %v284
    // Predicated region
    $region22: #{recognizer_forward.1} parent=1 // pred_check
      _
    $region23: #{recognizer_forward.1} parent=1 // pred_check_branch
      %289 = sbr.rel (0) target = $region25
    $region24: #{recognizer_forward.1} parent=1 // pred_region
      %291 = vsyncadd [#allocation4], 0
      %s293 = sshll.u32 [#allocation7], 4
      %s294 = int_to_ptr.vmem [resolvable:$true] %s293
      %s295 = sshll.u32 %s3, 4
      %s296 = int_to_ptr.hbm [resolvable:$true] %s295
      %298 = dma.vmem_to_hbm [thread:$0]  %s294, 128, %s296, [#allocation4]
    $region25: #{recognizer_forward.1} parent=1 // pred_fallthru
      _
    // Predicated region
    $region26: #{recognizer_forward.1} parent=1 // pred_check
      _
    $region27: #{recognizer_forward.1} parent=1 // pred_check_branch
      %300 = sbr.rel (0) target = $region29
    $region28: #{recognizer_forward.1} parent=1 // pred_region
      _
    $region29: #{recognizer_forward.1} parent=1 // pred_fallthru
      _
    // Predicated region
    $region30: #{recognizer_forward.1} parent=1 // pred_check
      _
    $region31: #{recognizer_forward.1} parent=1 // pred_check_branch
      %302 = sbr.rel (0) target = $region33
    $region32: #{recognizer_forward.1} parent=1 // pred_region
      %304 = dma.done [#allocation4], 128
    $region33: #{recognizer_forward.1} parent=1 // pred_fallthru
      _
    // Predicated region
    $region34: #{recognizer_forward.1} parent=1 // pred_check
      _
    $region35: #{recognizer_forward.1} parent=1 // pred_check_branch
      %306 = sbr.rel (0) target = $region37
    $region36: #{recognizer_forward.1} parent=1 // pred_region
      _
    $region37: #{recognizer_forward.1} parent=1 // pred_fallthru
      _
    %307 = vsyncpa [#allocation3], 1
    %308 = vsyncpa [#allocation6], 1
    %309 = vsyncpa [#allocation4], 1

</llo_original>
